<compile_context>
chip_gen: v5e
topology: v5e:2x2
jax: 0.10.0
libtpu: 0.0.40
codegen_flags: <defaults>
</compile_context>

<pallas_src>
import functools
import math

import jax
import jax.numpy as jnp
from jax.experimental import pallas as pl
from jax.experimental.pallas import tpu as pltpu

_LANE = 128


def _qnet_kernel(x_ref, w1_ref, b1_ref, w2_ref, b2_ref, w3_ref, b3_ref, out_ref):
    """Fused 3-layer MLP on one batch tile: relu(x@W1+b1) -> relu(.@W2+b2) -> .@W3+b3."""
    x = x_ref[...]

    h1 = jnp.dot(x, w1_ref[...], preferred_element_type=jnp.float32) + b1_ref[...]
    h1 = jnp.maximum(h1, 0.0).astype(w2_ref.dtype)

    h2 = jnp.dot(h1, w2_ref[...], preferred_element_type=jnp.float32) + b2_ref[...]
    h2 = jnp.maximum(h2, 0.0).astype(w3_ref.dtype)

    # W3/b3 are zero-padded to 128 output lanes -> lane-dense (tm, 128) store.
    q = jnp.dot(h2, w3_ref[...], preferred_element_type=jnp.float32) + b3_ref[...]
    out_ref[...] = q.astype(out_ref.dtype)


def _num_tensorcores():
    """v5e/v6e expose one TensorCore; v7x has 2 TCs that split a 'parallel' grid."""
    try:
        kind = jax.devices()[0].device_kind.lower()
    except Exception:
        return 1
    return 2 if "v7" in kind else 1


def _choose_tiling(batch, sublane):
    """Pick (padded_batch, rows_per_tile, num_tiles).

    Single grid step on single-TC chips (no per-step loop overhead); an even
    grid on dual-TC chips; per-tile rows capped at ~1024 for huge batches.
    Batch is padded only to the sublane granule, never to a full tile.
    """
    tiles = _num_tensorcores() if batch >= 2 * sublane else 1
    while -(-batch // tiles) > 1024:
        tiles *= 2
    step = tiles * sublane
    b_pad = -(-batch // step) * step
    return b_pad, b_pad // tiles, tiles


def pad_qnetwork_params(params, lane_pad=_LANE):
    """One-time lane padding of the output layer. Call at init, NOT per forward."""
    w3, b3 = params["w3"], params["b3"]
    hidden_size, action_size = w3.shape
    a_pad = max(lane_pad, -(-action_size // lane_pad) * lane_pad)
    w3_p = jnp.zeros((hidden_size, a_pad), w3.dtype).at[:, :action_size].set(w3)
    b3_p = jnp.zeros((1, a_pad), b3.dtype).at[:, :action_size].set(b3)
    out = dict(params)
    out["w3_padded"] = w3_p
    out["b3_padded"] = b3_p
    return out


@functools.partial(jax.jit, static_argnames=("action_size", "compute_dtype"))
def qnetwork_forward(state, padded_params, *, action_size=4, compute_dtype=jnp.float32):
    """Fused QNetwork forward pass with a single pallas_call.

    state:         (B, state_size) float32
    padded_params: output of pad_qnetwork_params (w3_padded/b3_padded pre-built)
    returns        (B, action_size) float32 Q-values
    """
    # MXU operands in compute_dtype (f32 or bf16); biases & accumulation stay f32.
    w1 = padded_params["w1"].astype(compute_dtype)
    w2 = padded_params["w2"].astype(compute_dtype)
    w3 = padded_params["w3_padded"].astype(compute_dtype)
    b1 = padded_params["b1"].astype(jnp.float32)
    b2 = padded_params["b2"].astype(jnp.float32)
    b3 = padded_params["b3_padded"].astype(jnp.float32)

    batch, state_size = state.shape
    hidden_size = w1.shape[1]
    a_pad = w3.shape[1]

    x = state.astype(compute_dtype)

    # Sublane granule: 8 rows for 32-bit, 16 for 16-bit packed dtypes.
    itemsize = jnp.dtype(compute_dtype).itemsize
    sublane = 8 * max(1, 4 // itemsize)
    b_pad, tm, tiles = _choose_tiling(batch, sublane)
    if b_pad != batch:
        x = jnp.pad(x, ((0, b_pad - batch), (0, 0)))

    flops = 2 * b_pad * (
        state_size * hidden_size + hidden_size * hidden_size + hidden_size * a_pad
    )
    bytes_accessed = (
        b_pad * state_size * itemsize                                   # activations in
        + (state_size + hidden_size + hidden_size) * hidden_size * 0    # (kept simple below)
        + (state_size * hidden_size + hidden_size * hidden_size + hidden_size * a_pad) * itemsize
        + (2 * hidden_size + a_pad) * 4                                 # biases (f32)
        + b_pad * a_pad * 4                                             # output
    )

    out_padded = pl.pallas_call(
        _qnet_kernel,
        out_shape=jax.ShapeDtypeStruct((b_pad, a_pad), jnp.float32),
        grid_spec=pl.GridSpec(
            grid=(tiles,),
            in_specs=[
                # activation tile streams over the batch grid
                pl.BlockSpec((tm, state_size), lambda i: (i, 0)),
                # weights / biases stay VMEM-resident (constant block index)
                pl.BlockSpec((state_size, hidden_size), lambda i: (0, 0)),
                pl.BlockSpec((1, hidden_size), lambda i: (0, 0)),
                pl.BlockSpec((hidden_size, hidden_size), lambda i: (0, 0)),
                pl.BlockSpec((1, hidden_size), lambda i: (0, 0)),
                pl.BlockSpec((hidden_size, a_pad), lambda i: (0, 0)),
                pl.BlockSpec((1, a_pad), lambda i: (0, 0)),
            ],
            out_specs=pl.BlockSpec((tm, a_pad), lambda i: (i, 0)),
        ),
        compiler_params=pltpu.CompilerParams(
            dimension_semantics=("parallel",),
        ),
        cost_estimate=pl.CostEstimate(
            flops=flops, transcendentals=0, bytes_accessed=bytes_accessed
        ),
    )(x, w1, b1, w2, b2, w3, b3)

    # Strip batch padding and the zero-padded action lanes (fused under jit).
    return out_padded[:batch, :action_size]


def init_qnetwork_params(key, state_size=16, action_size=4, hidden_size=128):
    """Deterministic init mirroring PyTorch nn.Linear default U(-1/sqrt(fan_in), +)."""
    keys = jax.random.split(key, 6)

    def linear(kw, kb, fan_in, fan_out):
        bound = 1.0 / math.sqrt(fan_in)
        # stored as (in, out) so the kernel computes x @ W
        w = jax.random.uniform(kw, (fan_in, fan_out), jnp.float32, -bound, bound)
        b = jax.random.uniform(kb, (1, fan_out), jnp.float32, -bound, bound)
        return w, b

    w1, b1 = linear(keys[0], keys[1], state_size, hidden_size)
    w2, b2 = linear(keys[2], keys[3], hidden_size, hidden_size)
    w3, b3 = linear(keys[4], keys[5], hidden_size, action_size)
    return {"w1": w1, "b1": b1, "w2": w2, "b2": b2, "w3": w3, "b3": b3}


def _reference_forward(state, params):
    h1 = jnp.maximum(state @ params["w1"] + params["b1"], 0.0)
    h2 = jnp.maximum(h1 @ params["w2"] + params["b2"], 0.0)
    return h2 @ params["w3"] + params["b3"]


# TODO(synk): the one-hot FrozenLake input could skip the layer-1 matmul via a
# scalar-prefetched W1 row gather; kept the general dense path for module parity.

if __name__ == "__main__":
    key = jax.random.PRNGKey(0)
    k_params, k_state = jax.random.split(key)

    state_size, action_size, hidden_size = 16, 4, 128
    # Replay-minibatch-sized batch; deliberately not a multiple of 128 so the
    # sublane-only batch padding / tiling selection path is exercised.
    batch = 200

    params = init_qnetwork_params(k_params, state_size, action_size, hidden_size)
    padded_params = pad_qnetwork_params(params)   # one-time lane padding

    # one-hot state vectors, like the DQN uses for FrozenLake
    state_ids = jax.random.randint(k_state, (batch,), 0, state_size)
    states = jax.nn.one_hot(state_ids, state_size, dtype=jnp.float32)

    ref = _reference_forward(states, params)

    # f32 path (exact parity with the PyTorch module)
    q_values = qnetwork_forward(states, padded_params, action_size=action_size)
    q_values = jax.block_until_ready(q_values)
    assert q_values.shape == (batch, action_size)
    assert jnp.allclose(q_values, ref, atol=1e-5, rtol=1e-5)

    # bf16-operand path (halved DMA / native MXU format on v6e & v7x), f32 accumulation
    q_bf16 = qnetwork_forward(
        states, padded_params, action_size=action_size, compute_dtype=jnp.bfloat16
    )
    q_bf16 = jax.block_until_ready(q_bf16)
    assert q_bf16.shape == (batch, action_size)
    assert jnp.allclose(q_bf16, ref, atol=1e-1, rtol=1e-1)

    print("KERNEL_OK")
</pallas_src>

<mosaic_0001>
module attributes {stable_mosaic.version = 11 : i64} {
  func.func @_qnet_kernel(%arg0: i32, %arg1: memref<200x16xf32, #tpu.memory_space<vmem>>, %arg2: memref<16x128xf32, #tpu.memory_space<vmem>>, %arg3: memref<1x128xf32, #tpu.memory_space<vmem>>, %arg4: memref<128x128xf32, #tpu.memory_space<vmem>>, %arg5: memref<1x128xf32, #tpu.memory_space<vmem>>, %arg6: memref<128x128xf32, #tpu.memory_space<vmem>>, %arg7: memref<1x128xf32, #tpu.memory_space<vmem>>, %arg8: memref<200x128xf32, #tpu.memory_space<vmem>>) attributes {dimension_semantics = [#tpu.dimension_semantics<parallel>], iteration_bounds = array<i64: 1>, scalar_prefetch = 0 : i64, scratch_operands = 0 : i64, tpu.core_type = #tpu.core_type<tc>, window_params = [{transform_indices = @transform_0, window_bounds = array<i64: 200, 16>}, {pipeline_mode = #tpu.pipeline_mode<synchronous>, transform_indices = @transform_1, window_bounds = array<i64: 16, 128>}, {pipeline_mode = #tpu.pipeline_mode<synchronous>, transform_indices = @transform_2, window_bounds = array<i64: 1, 128>}, {pipeline_mode = #tpu.pipeline_mode<synchronous>, transform_indices = @transform_3, window_bounds = array<i64: 128, 128>}, {pipeline_mode = #tpu.pipeline_mode<synchronous>, transform_indices = @transform_4, window_bounds = array<i64: 1, 128>}, {pipeline_mode = #tpu.pipeline_mode<synchronous>, transform_indices = @transform_5, window_bounds = array<i64: 128, 128>}, {pipeline_mode = #tpu.pipeline_mode<synchronous>, transform_indices = @transform_6, window_bounds = array<i64: 1, 128>}, {transform_indices = @transform_7, window_bounds = array<i64: 200, 128>}]} {
    %c0 = arith.constant 0 : index
    %c0_0 = arith.constant 0 : index
    %0 = vector.load %arg1[%c0, %c0_0] : memref<200x16xf32, #tpu.memory_space<vmem>>, vector<200x16xf32>
    %c0_1 = arith.constant 0 : index
    %c0_2 = arith.constant 0 : index
    %1 = vector.load %arg2[%c0_1, %c0_2] : memref<16x128xf32, #tpu.memory_space<vmem>>, vector<16x128xf32>
    %cst = arith.constant dense<0.000000e+00> : vector<200x128xf32>
    %2 = tpu.matmul %0, %1, %cst {dimension_numbers = #tpu.dot_dimension_numbers<[1], [0], [0], [1], [0, 0, 1, 1], [], []>} : vector<200x16xf32>, vector<16x128xf32>, vector<200x128xf32> -> vector<200x128xf32>
    %c0_3 = arith.constant 0 : index
    %c0_4 = arith.constant 0 : index
    %3 = vector.load %arg3[%c0_3, %c0_4] : memref<1x128xf32, #tpu.memory_space<vmem>>, vector<1x128xf32>
    %4 = vector.broadcast %3 : vector<1x128xf32> to vector<200x128xf32>
    %5 = arith.addf %2, %4 : vector<200x128xf32>
    %cst_5 = arith.constant 0.000000e+00 : f32
    %6 = vector.broadcast %cst_5 : f32 to vector<200x128xf32>
    %7 = arith.maximumf %5, %6 : vector<200x128xf32>
    %c0_6 = arith.constant 0 : index
    %c0_7 = arith.constant 0 : index
    %8 = vector.load %arg4[%c0_6, %c0_7] : memref<128x128xf32, #tpu.memory_space<vmem>>, vector<128x128xf32>
    %cst_8 = arith.constant dense<0.000000e+00> : vector<200x128xf32>
    %9 = tpu.matmul %7, %8, %cst_8 {dimension_numbers = #tpu.dot_dimension_numbers<[1], [0], [0], [1], [0, 0, 1, 1], [], []>} : vector<200x128xf32>, vector<128x128xf32>, vector<200x128xf32> -> vector<200x128xf32>
    %c0_9 = arith.constant 0 : index
    %c0_10 = arith.constant 0 : index
    %10 = vector.load %arg5[%c0_9, %c0_10] : memref<1x128xf32, #tpu.memory_space<vmem>>, vector<1x128xf32>
    %11 = vector.broadcast %10 : vector<1x128xf32> to vector<200x128xf32>
    %12 = arith.addf %9, %11 : vector<200x128xf32>
    %cst_11 = arith.constant 0.000000e+00 : f32
    %13 = vector.broadcast %cst_11 : f32 to vector<200x128xf32>
    %14 = arith.maximumf %12, %13 : vector<200x128xf32>
    %c0_12 = arith.constant 0 : index
    %c0_13 = arith.constant 0 : index
    %15 = vector.load %arg6[%c0_12, %c0_13] : memref<128x128xf32, #tpu.memory_space<vmem>>, vector<128x128xf32>
    %cst_14 = arith.constant dense<0.000000e+00> : vector<200x128xf32>
    %16 = tpu.matmul %14, %15, %cst_14 {dimension_numbers = #tpu.dot_dimension_numbers<[1], [0], [0], [1], [0, 0, 1, 1], [], []>} : vector<200x128xf32>, vector<128x128xf32>, vector<200x128xf32> -> vector<200x128xf32>
    %c0_15 = arith.constant 0 : index
    %c0_16 = arith.constant 0 : index
    %17 = vector.load %arg7[%c0_15, %c0_16] : memref<1x128xf32, #tpu.memory_space<vmem>>, vector<1x128xf32>
    %18 = vector.broadcast %17 : vector<1x128xf32> to vector<200x128xf32>
    %19 = arith.addf %16, %18 : vector<200x128xf32>
    %c0_17 = arith.constant 0 : index
    %c0_18 = arith.constant 0 : index
    %20 = vector.load %arg8[%c0_17, %c0_18] : memref<200x128xf32, #tpu.memory_space<vmem>>, vector<200x128xf32>
    tpu.vector_store %arg8[%c0_17, %c0_18], %19 {strides = array<i32>} : memref<200x128xf32, #tpu.memory_space<vmem>>, vector<200x128xf32>,
    return
  }
  func.func @transform_0(%arg0: i32) -> (i32, i32) {
    %c0_i32 = arith.constant 0 : i32
    %c0_i32_0 = arith.constant 0 : i32
    return %arg0, %c0_i32 : i32, i32
  }
  func.func @transform_1(%arg0: i32) -> (i32, i32) {
    %c0_i32 = arith.constant 0 : i32
    %c0_i32_0 = arith.constant 0 : i32
    %c0_i32_1 = arith.constant 0 : i32
    return %c0_i32, %c0_i32_0 : i32, i32
  }
  func.func @transform_2(%arg0: i32) -> (i32, i32) {
    %c0_i32 = arith.constant 0 : i32
    %c0_i32_0 = arith.constant 0 : i32
    %c0_i32_1 = arith.constant 0 : i32
    return %c0_i32, %c0_i32_0 : i32, i32
  }
  func.func @transform_3(%arg0: i32) -> (i32, i32) {
    %c0_i32 = arith.constant 0 : i32
    %c0_i32_0 = arith.constant 0 : i32
    %c0_i32_1 = arith.constant 0 : i32
    return %c0_i32, %c0_i32_0 : i32, i32
  }
  func.func @transform_4(%arg0: i32) -> (i32, i32) {
    %c0_i32 = arith.constant 0 : i32
    %c0_i32_0 = arith.constant 0 : i32
    %c0_i32_1 = arith.constant 0 : i32
    return %c0_i32, %c0_i32_0 : i32, i32
  }
  func.func @transform_5(%arg0: i32) -> (i32, i32) {
    %c0_i32 = arith.constant 0 : i32
    %c0_i32_0 = arith.constant 0 : i32
    %c0_i32_1 = arith.constant 0 : i32
    return %c0_i32, %c0_i32_0 : i32, i32
  }
  func.func @transform_6(%arg0: i32) -> (i32, i32) {
    %c0_i32 = arith.constant 0 : i32
    %c0_i32_0 = arith.constant 0 : i32
    %c0_i32_1 = arith.constant 0 : i32
    return %c0_i32, %c0_i32_0 : i32, i32
  }
  func.func @transform_7(%arg0: i32) -> (i32, i32) {
    %c0_i32 = arith.constant 0 : i32
    %c0_i32_0 = arith.constant 0 : i32
    return %arg0, %c0_i32 : i32, i32
  }
}

</mosaic_0001>

<llo_original>
// kernel: qnetwork_forward.1
$region0: #{qnetwork_forward.1}
  #allocation0 [shape = 'u32[]', space=smem, size = 0x4, offset = 0x4, fixed_abs, tag = 'smem constant byte address 0x4 - core index']
  #allocation1 [shape = 'u32[72,128]{1,0:T(1,128)}', space=vmem, size = 0x9000, scoped, tag = 'internal scratch']
  %s0 = inlined_call_operand.vmem [shape: f32[200,16], index: 0, kind: input, shape index: {}]
  %s1 = inlined_call_operand.vmem [shape: f32[16,128], index: 1, kind: input, shape index: {}]
  %s2 = inlined_call_operand.vmem [shape: f32[1,128], index: 2, kind: input, shape index: {}]
  %s3 = inlined_call_operand.vmem [shape: f32[128,128], index: 3, kind: input, shape index: {}]
  %s4 = inlined_call_operand.vmem [shape: f32[1,128], index: 4, kind: input, shape index: {}]
  %s5 = inlined_call_operand.hbm [shape: f32[128,128], index: 5, kind: input, shape index: {}]
  %s6 = inlined_call_operand.vmem [shape: f32[1,128], index: 6, kind: input, shape index: {}]
  %s7 = inlined_call_operand.vmem [shape: f32[200,128], index: 7, kind: output, shape index: {}]
  %s8 = sld [smem:[#allocation0]]
  $region42: #{qnetwork_forward.1} parent=0
    _
  %s10 = ssub.s32 1, %s8
  %s11 = scalar_select 0, %s10, %s8
  $region1: #{qnetwork_forward.1} parent=0
    #allocation2 [shape = 'u8[65536]{0}', space=vmem, size = 0x10000, scoped, tag = 'input window, operand 5, single buffered']
    #allocation3 [shape = 's32[1]{0}', space=sflag, size = 0x4, scoped, tag = 'scoped memory for qnetwork_forward.1']
    %12 = vsyncpa [#allocation3], 0
    // Predicated region
    $region2: #{qnetwork_forward.1} parent=1 // pred_check
      _
    $region3: #{qnetwork_forward.1} parent=1 // pred_check_branch
      %14 = sbr.rel (0) target = $region5
    $region4: #{qnetwork_forward.1} parent=1 // pred_region
      _
    $region5: #{qnetwork_forward.1} parent=1 // pred_fallthru
      _
    // Predicated region
    $region6: #{qnetwork_forward.1} parent=1 // pred_check
      _
    $region7: #{qnetwork_forward.1} parent=1 // pred_check_branch
      %16 = sbr.rel (0) target = $region9
    $region8: #{qnetwork_forward.1} parent=1 // pred_region
      _
    $region9: #{qnetwork_forward.1} parent=1 // pred_fallthru
      _
    // Predicated region
    $region10: #{qnetwork_forward.1} parent=1 // pred_check
      _
    $region11: #{qnetwork_forward.1} parent=1 // pred_check_branch
      %18 = sbr.rel (0) target = $region13
    $region12: #{qnetwork_forward.1} parent=1 // pred_region
      _
    $region13: #{qnetwork_forward.1} parent=1 // pred_fallthru
      _
    // Predicated region
    $region14: #{qnetwork_forward.1} parent=1 // pred_check
      _
    $region15: #{qnetwork_forward.1} parent=1 // pred_check_branch
      %20 = sbr.rel (0) target = $region17
    $region16: #{qnetwork_forward.1} parent=1 // pred_region
      _
    $region17: #{qnetwork_forward.1} parent=1 // pred_fallthru
      _
    // Predicated region
    $region18: #{qnetwork_forward.1} parent=1 // pred_check
      _
    $region19: #{qnetwork_forward.1} parent=1 // pred_check_branch
      %22 = sbr.rel (0) target = $region21
    $region20: #{qnetwork_forward.1} parent=1 // pred_region
      _
    $region21: #{qnetwork_forward.1} parent=1 // pred_fallthru
      _
    // Predicated region
    $region22: #{qnetwork_forward.1} parent=1 // pred_check
      _
    $region23: #{qnetwork_forward.1} parent=1 // pred_check_branch
      %24 = sbr.rel (0) target = $region25
    $region24: #{qnetwork_forward.1} parent=1 // pred_region
      %26 = vsyncadd [#allocation3], 0
      %s27 = sshll.u32 %s5, 4
      %s28 = int_to_ptr.hbm [resolvable:$true] %s27
      %s29 = sshll.u32 [#allocation2], 4
      %s30 = int_to_ptr.vmem [resolvable:$true] %s29
      %35 = dma.hbm_to_vmem [thread:$0]  %s28, 2048, %s30, [#allocation3], 128, 128, 8
    $region25: #{qnetwork_forward.1} parent=1 // pred_fallthru
      _
    // Predicated region
    $region26: #{qnetwork_forward.1} parent=1 // pred_check
      _
    $region27: #{qnetwork_forward.1} parent=1 // pred_check_branch
      %37 = sbr.rel (0) target = $region29
    $region28: #{qnetwork_forward.1} parent=1 // pred_region
      _
    $region29: #{qnetwork_forward.1} parent=1 // pred_fallthru
      _
    // Predicated region
    $region30: #{qnetwork_forward.1} parent=1 // pred_check
      _
    $region31: #{qnetwork_forward.1} parent=1 // pred_check_branch
      %39 = sbr.rel (0) target = $region33
    $region32: #{qnetwork_forward.1} parent=1 // pred_region
      %41 = dma.done [#allocation3], 2048
    $region33: #{qnetwork_forward.1} parent=1 // pred_fallthru
      _
    %v42 = vld [vmem:[%s0] sm:$0xff]
    %v43 = vld [vmem:[%s0 + $0x8] sm:$0xff]
    %v44 = vld [vmem:[%s0 + $0x10] sm:$0xff]
    %v45 = vld [vmem:[%s0 + $0x18] sm:$0xff]
    %v46 = vld [vmem:[%s0 + $0x20] sm:$0xff]
    %v47 = vld [vmem:[%s0 + $0x28] sm:$0xff]
    %v48 = vld [vmem:[%s0 + $0x30] sm:$0xff]
    %v49 = vld [vmem:[%s0 + $0x38] sm:$0xff]
    %v50 = vld [vmem:[%s0 + $0x40] sm:$0xff]
    %v51 = vld [vmem:[%s0 + $0x48] sm:$0xff]
    %v52 = vld [vmem:[%s0 + $0x50] sm:$0xff]
    %v53 = vld [vmem:[%s0 + $0x58] sm:$0xff]
    %v54 = vld [vmem:[%s0 + $0x60] sm:$0xff]
    %v55 = vld [vmem:[%s0 + $0x68] sm:$0xff]
    %v56 = vld [vmem:[%s0 + $0x70] sm:$0xff]
    %v57 = vld [vmem:[%s0 + $0x78] sm:$0xff]
    %v58 = vld [vmem:[%s0 + $0x80] sm:$0xff]
    %v59 = vld [vmem:[%s0 + $0x88] sm:$0xff]
    %v60 = vld [vmem:[%s0 + $0x90] sm:$0xff]
    %v61 = vld [vmem:[%s0 + $0x98] sm:$0xff]
    %v62 = vld [vmem:[%s0 + $0xa0] sm:$0xff]
    %v63 = vld [vmem:[%s0 + $0xa8] sm:$0xff]
    %v64 = vld [vmem:[%s0 + $0xb0] sm:$0xff]
    %v65 = vld [vmem:[%s0 + $0xb8] sm:$0xff]
    %v66 = vld [vmem:[%s0 + $0xc0] sm:$0xff]
    %v67 = vld [vmem:[%s1] sm:$0xff]
    %v68 = vld [vmem:[%s1 + $0x8] sm:$0xff]
    %v69 = vld [vmem:[%s2] sm:$0x1]
    %v71 = vperm.slane %v69, 0
    %vm73 = vcmask 130048
    %v75 = vsel %vm73, %v42, 0
    %v78 = vsel %vm73, %v43, 0
    %v81 = vsel %vm73, %v44, 0
    %v84 = vsel %vm73, %v45, 0
    %v87 = vsel %vm73, %v46, 0
    %v90 = vsel %vm73, %v47, 0
    %v93 = vsel %vm73, %v48, 0
    %v96 = vsel %vm73, %v49, 0
    %v99 = vsel %vm73, %v50, 0
    %v102 = vsel %vm73, %v51, 0
    %v105 = vsel %vm73, %v52, 0
    %v108 = vsel %vm73, %v53, 0
    %v111 = vsel %vm73, %v54, 0
    %v114 = vsel %vm73, %v55, 0
    %v117 = vsel %vm73, %v56, 0
    %v120 = vsel %vm73, %v57, 0
    %v123 = vsel %vm73, %v58, 0
    %v126 = vsel %vm73, %v59, 0
    %v129 = vsel %vm73, %v60, 0
    %v132 = vsel %vm73, %v61, 0
    %v135 = vsel %vm73, %v62, 0
    %v138 = vsel %vm73, %v63, 0
    %v141 = vsel %vm73, %v64, 0
    %v144 = vsel %vm73, %v65, 0
    %v147 = vsel %vm73, %v66, 0
    %149 = vmatpush.msra.mxu0 0.0
    %150 = vmatpush.msra.mxu0 0.0
    %151 = vmatpush.msra.mxu0 0.0
    %152 = vmatpush.msra.mxu0 0.0
    %153 = vmatpush.msra.mxu0 0.0
    %154 = vmatpush.msra.mxu0 0.0
    %155 = vmatpush.msra.mxu0 0.0
    %156 = vmatpush.msra.mxu0 0.0
    %157 = vmatpush.msra.mxu0 0.0
    %158 = vmatpush.msra.mxu0 0.0
    %159 = vmatpush.msra.mxu0 0.0
    %160 = vmatpush.msra.mxu0 0.0
    %161 = vmatpush.msra.mxu0 0.0
    %162 = vmatpush.msra.mxu0 0.0
    %163 = vmatpush.msra.mxu0 %v68
    %164 = vmatpush.msra.mxu0 %v67
    %165 = vmatmul.f32.gmra.mxu0 %v75
    %v166 = vpop.f32.mrf.mxu0
    %v167 = vadd.f32 %v71, %v166
    %168 = vmatmul.f32.gmra.mxu0 %v78
    %v169 = vpop.f32.mrf.mxu0
    %v170 = vadd.f32 %v71, %v169
    %171 = vmatmul.f32.gmra.mxu0 %v81
    %v172 = vpop.f32.mrf.mxu0
    %v173 = vadd.f32 %v71, %v172
    %174 = vmatmul.f32.gmra.mxu0 %v84
    %v175 = vpop.f32.mrf.mxu0
    %v176 = vadd.f32 %v71, %v175
    %177 = vmatmul.f32.gmra.mxu0 %v87
    %v178 = vpop.f32.mrf.mxu0
    %v179 = vadd.f32 %v71, %v178
    %180 = vmatmul.f32.gmra.mxu0 %v90
    %v181 = vpop.f32.mrf.mxu0
    %v182 = vadd.f32 %v71, %v181
    %183 = vmatmul.f32.gmra.mxu0 %v93
    %v184 = vpop.f32.mrf.mxu0
    %v185 = vadd.f32 %v71, %v184
    %186 = vmatmul.f32.gmra.mxu0 %v96
    %v187 = vpop.f32.mrf.mxu0
    %v188 = vadd.f32 %v71, %v187
    %189 = vmatmul.f32.gmra.mxu0 %v99
    %v190 = vpop.f32.mrf.mxu0
    %v191 = vadd.f32 %v71, %v190
    %192 = vmatmul.f32.gmra.mxu0 %v102
    %v193 = vpop.f32.mrf.mxu0
    %v194 = vadd.f32 %v71, %v193
    %195 = vmatmul.f32.gmra.mxu0 %v105
    %v196 = vpop.f32.mrf.mxu0
    %v197 = vadd.f32 %v71, %v196
    %198 = vmatmul.f32.gmra.mxu0 %v108
    %v199 = vpop.f32.mrf.mxu0
    %v200 = vadd.f32 %v71, %v199
    %201 = vmatmul.f32.gmra.mxu0 %v111
    %v202 = vpop.f32.mrf.mxu0
    %v203 = vadd.f32 %v71, %v202
    %204 = vmatmul.f32.gmra.mxu0 %v114
    %v205 = vpop.f32.mrf.mxu0
    %v206 = vadd.f32 %v71, %v205
    %207 = vmatmul.f32.gmra.mxu0 %v117
    %v208 = vpop.f32.mrf.mxu0
    %v209 = vadd.f32 %v71, %v208
    %210 = vmatmul.f32.gmra.mxu0 %v120
    %v211 = vpop.f32.mrf.mxu0
    %v212 = vadd.f32 %v71, %v211
    %213 = vmatmul.f32.gmra.mxu0 %v123
    %v214 = vpop.f32.mrf.mxu0
    %v215 = vadd.f32 %v71, %v214
    %216 = vmatmul.f32.gmra.mxu0 %v126
    %v217 = vpop.f32.mrf.mxu0
    %v218 = vadd.f32 %v71, %v217
    %219 = vmatmul.f32.gmra.mxu0 %v129
    %v220 = vpop.f32.mrf.mxu0
    %v221 = vadd.f32 %v71, %v220
    %222 = vmatmul.f32.gmra.mxu0 %v132
    %v223 = vpop.f32.mrf.mxu0
    %v224 = vadd.f32 %v71, %v223
    %225 = vmatmul.f32.gmra.mxu0 %v135
    %v226 = vpop.f32.mrf.mxu0
    %v227 = vadd.f32 %v71, %v226
    %228 = vmatmul.f32.gmra.mxu0 %v138
    %v229 = vpop.f32.mrf.mxu0
    %v230 = vadd.f32 %v71, %v229
    %231 = vmatmul.f32.gmra.mxu0 %v141
    %v232 = vpop.f32.mrf.mxu0
    %v233 = vadd.f32 %v71, %v232
    %234 = vmatmul.f32.gmra.mxu0 %v144
    %v235 = vpop.f32.mrf.mxu0
    %v236 = vadd.f32 %v71, %v235
    %237 = vmatmul.f32.gmra.mxu0 %v147
    %v238 = vpop.f32.mrf.mxu0
    %v239 = vadd.f32 %v71, %v238
    %240 = vdwg.mxu0
    %v241 = vmax.f32 %v167, 0.0
    %v242 = vmax.f32 %v170, 0.0
    %v243 = vmax.f32 %v173, 0.0
    %v244 = vmax.f32 %v176, 0.0
    %v245 = vmax.f32 %v179, 0.0
    %v246 = vmax.f32 %v182, 0.0
    %v247 = vmax.f32 %v185, 0.0
    %v248 = vmax.f32 %v188, 0.0
    %v249 = vmax.f32 %v191, 0.0
    %v250 = vmax.f32 %v194, 0.0
    %v251 = vmax.f32 %v197, 0.0
    %v252 = vmax.f32 %v200, 0.0
    %v253 = vmax.f32 %v203, 0.0
    %v254 = vmax.f32 %v206, 0.0
    %v255 = vmax.f32 %v209, 0.0
    %v256 = vmax.f32 %v212, 0.0
    %v257 = vmax.f32 %v215, 0.0
    %v258 = vmax.f32 %v218, 0.0
    %v259 = vmax.f32 %v221, 0.0
    %v260 = vmax.f32 %v224, 0.0
    %v261 = vmax.f32 %v227, 0.0
    %v262 = vmax.f32 %v230, 0.0
    %v263 = vmax.f32 %v233, 0.0
    %v264 = vmax.f32 %v236, 0.0
    %v265 = vmax.f32 %v239, 0.0
    %v266 = vld [vmem:[%s3] sm:$0xff]
    %v267 = vld [vmem:[%s3 + $0x8] sm:$0xff]
    %v268 = vld [vmem:[%s3 + $0x10] sm:$0xff]
    %v269 = vld [vmem:[%s3 + $0x18] sm:$0xff]
    %v270 = vld [vmem:[%s3 + $0x20] sm:$0xff]
    %v271 = vld [vmem:[%s3 + $0x28] sm:$0xff]
    %v272 = vld [vmem:[%s3 + $0x30] sm:$0xff]
    %v273 = vld [vmem:[%s3 + $0x38] sm:$0xff]
    %v274 = vld [vmem:[%s3 + $0x40] sm:$0xff]
    %v275 = vld [vmem:[%s3 + $0x48] sm:$0xff]
    %v276 = vld [vmem:[%s3 + $0x50] sm:$0xff]
    %v277 = vld [vmem:[%s3 + $0x58] sm:$0xff]
    %v278 = vld [vmem:[%s3 + $0x60] sm:$0xff]
    %v279 = vld [vmem:[%s3 + $0x68] sm:$0xff]
    %v280 = vld [vmem:[%s3 + $0x70] sm:$0xff]
    %v281 = vld [vmem:[%s3 + $0x78] sm:$0xff]
    %v282 = vld [vmem:[%s4] sm:$0x1]
    %v284 = vperm.slane %v282, 0
    %286 = vmatpush.msra.mxu0 %v281
    %287 = vmatpush.msra.mxu0 %v280
    %288 = vmatpush.msra.mxu0 %v279
    %289 = vmatpush.msra.mxu0 %v278
    %290 = vmatpush.msra.mxu0 %v277
    %291 = vmatpush.msra.mxu0 %v276
    %292 = vmatpush.msra.mxu0 %v275
    %293 = vmatpush.msra.mxu0 %v274
    %294 = vmatpush.msra.mxu0 %v273
    %295 = vmatpush.msra.mxu0 %v272
    %296 = vmatpush.msra.mxu0 %v271
    %297 = vmatpush.msra.mxu0 %v270
    %298 = vmatpush.msra.mxu0 %v269
    %299 = vmatpush.msra.mxu0 %v268
    %300 = vmatpush.msra.mxu0 %v267
    %301 = vmatpush.msra.mxu0 %v266
    %302 = vmatmul.f32.gmra.mxu0 %v241
    %v303 = vpop.f32.mrf.mxu0
    %v304 = vadd.f32 %v284, %v303
    %305 = vmatmul.f32.gmra.mxu0 %v242
    %v306 = vpop.f32.mrf.mxu0
    %v307 = vadd.f32 %v284, %v306
    %308 = vmatmul.f32.gmra.mxu0 %v243
    %v309 = vpop.f32.mrf.mxu0
    %v310 = vadd.f32 %v284, %v309
    %311 = vmatmul.f32.gmra.mxu0 %v244
    %v312 = vpop.f32.mrf.mxu0
    %v313 = vadd.f32 %v284, %v312
    %314 = vmatmul.f32.gmra.mxu0 %v245
    %v315 = vpop.f32.mrf.mxu0
    %v316 = vadd.f32 %v284, %v315
    %317 = vmatmul.f32.gmra.mxu0 %v246
    %v318 = vpop.f32.mrf.mxu0
    %v319 = vadd.f32 %v284, %v318
    %320 = vmatmul.f32.gmra.mxu0 %v247
    %v321 = vpop.f32.mrf.mxu0
    %v322 = vadd.f32 %v284, %v321
    %323 = vmatmul.f32.gmra.mxu0 %v248
    %v324 = vpop.f32.mrf.mxu0
    %v325 = vadd.f32 %v284, %v324
    %326 = vmatmul.f32.gmra.mxu0 %v249
    %v327 = vpop.f32.mrf.mxu0
    %v328 = vadd.f32 %v284, %v327
    %329 = vmatmul.f32.gmra.mxu0 %v250
    %v330 = vpop.f32.mrf.mxu0
    %v331 = vadd.f32 %v284, %v330
    %332 = vmatmul.f32.gmra.mxu0 %v251
    %v333 = vpop.f32.mrf.mxu0
    %v334 = vadd.f32 %v284, %v333
    %335 = vmatmul.f32.gmra.mxu0 %v252
    %v336 = vpop.f32.mrf.mxu0
    %v337 = vadd.f32 %v284, %v336
    %338 = vmatmul.f32.gmra.mxu0 %v253
    %v339 = vpop.f32.mrf.mxu0
    %v340 = vadd.f32 %v284, %v339
    %341 = vmatmul.f32.gmra.mxu0 %v254
    %v342 = vpop.f32.mrf.mxu0
    %v343 = vadd.f32 %v284, %v342
    %344 = vmatmul.f32.gmra.mxu0 %v255
    %v345 = vpop.f32.mrf.mxu0
    %v346 = vadd.f32 %v284, %v345
    %347 = vmatmul.f32.gmra.mxu0 %v256
    %v348 = vpop.f32.mrf.mxu0
    %v349 = vadd.f32 %v284, %v348
    %350 = vmatmul.f32.gmra.mxu0 %v257
    %v351 = vpop.f32.mrf.mxu0
    %v352 = vadd.f32 %v284, %v351
    %353 = vmatmul.f32.gmra.mxu0 %v258
    %v354 = vpop.f32.mrf.mxu0
    %v355 = vadd.f32 %v284, %v354
    %356 = vmatmul.f32.gmra.mxu0 %v259
    %v357 = vpop.f32.mrf.mxu0
    %v358 = vadd.f32 %v284, %v357
    %359 = vmatmul.f32.gmra.mxu0 %v260
    %v360 = vpop.f32.mrf.mxu0
    %v361 = vadd.f32 %v284, %v360
    %362 = vmatmul.f32.gmra.mxu0 %v261
    %v363 = vpop.f32.mrf.mxu0
    %v364 = vadd.f32 %v284, %v363
    %365 = vmatmul.f32.gmra.mxu0 %v262
    %v366 = vpop.f32.mrf.mxu0
    %v367 = vadd.f32 %v284, %v366
    %368 = vmatmul.f32.gmra.mxu0 %v263
    %v369 = vpop.f32.mrf.mxu0
    %v370 = vadd.f32 %v284, %v369
    %371 = vmatmul.f32.gmra.mxu0 %v264
    %v372 = vpop.f32.mrf.mxu0
    %v373 = vadd.f32 %v284, %v372
    %374 = vmatmul.f32.gmra.mxu0 %v265
    %v375 = vpop.f32.mrf.mxu0
    %v376 = vadd.f32 %v284, %v375
    %377 = vdwg.mxu0
    %v378 = vmax.f32 %v304, 0.0
    %v379 = vmax.f32 %v307, 0.0
    %v380 = vmax.f32 %v310, 0.0
    %v381 = vmax.f32 %v313, 0.0
    %v382 = vmax.f32 %v316, 0.0
    %v383 = vmax.f32 %v319, 0.0
    %v384 = vmax.f32 %v322, 0.0
    %v385 = vmax.f32 %v325, 0.0
    %v386 = vmax.f32 %v328, 0.0
    %v387 = vmax.f32 %v331, 0.0
    %v388 = vmax.f32 %v334, 0.0
    %v389 = vmax.f32 %v337, 0.0
    %v390 = vmax.f32 %v340, 0.0
    %v391 = vmax.f32 %v343, 0.0
    %v392 = vmax.f32 %v346, 0.0
    %v393 = vmax.f32 %v349, 0.0
    %v394 = vmax.f32 %v352, 0.0
    %v395 = vmax.f32 %v355, 0.0
    %v396 = vmax.f32 %v358, 0.0
    %v397 = vmax.f32 %v361, 0.0
    %v398 = vmax.f32 %v364, 0.0
    %v399 = vmax.f32 %v367, 0.0
    %v400 = vmax.f32 %v370, 0.0
    %v401 = vmax.f32 %v373, 0.0
    %v402 = vmax.f32 %v376, 0.0
    %v403 = vld [vmem:[#allocation2] sm:$0xff]
    %v404 = vld [vmem:[#allocation2 + $0x8] sm:$0xff]
    %v405 = vld [vmem:[#allocation2 + $0x10] sm:$0xff]
    %v406 = vld [vmem:[#allocation2 + $0x18] sm:$0xff]
    %v407 = vld [vmem:[#allocation2 + $0x20] sm:$0xff]
    %v408 = vld [vmem:[#allocation2 + $0x28] sm:$0xff]
    %v409 = vld [vmem:[#allocation2 + $0x30] sm:$0xff]
    %v410 = vld [vmem:[#allocation2 + $0x38] sm:$0xff]
    %v411 = vld [vmem:[#allocation2 + $0x40] sm:$0xff]
    %v412 = vld [vmem:[#allocation2 + $0x48] sm:$0xff]
    %v413 = vld [vmem:[#allocation2 + $0x50] sm:$0xff]
    %v414 = vld [vmem:[#allocation2 + $0x58] sm:$0xff]
    %v415 = vld [vmem:[#allocation2 + $0x60] sm:$0xff]
    %v416 = vld [vmem:[#allocation2 + $0x68] sm:$0xff]
    %v417 = vld [vmem:[#allocation2 + $0x70] sm:$0xff]
    %v418 = vld [vmem:[#allocation2 + $0x78] sm:$0xff]
    %v419 = vld [vmem:[%s6] sm:$0x1]
    %v421 = vperm.slane %v419, 0
    %423 = vmatpush.msra.mxu0 %v418
    %424 = vmatpush.msra.mxu0 %v417
    %425 = vmatpush.msra.mxu0 %v416
    %426 = vmatpush.msra.mxu0 %v415
    %427 = vmatpush.msra.mxu0 %v414
    %428 = vmatpush.msra.mxu0 %v413
    %429 = vmatpush.msra.mxu0 %v412
    %430 = vmatpush.msra.mxu0 %v411
    %431 = vmatpush.msra.mxu0 %v410
    %432 = vmatpush.msra.mxu0 %v409
    %433 = vmatpush.msra.mxu0 %v408
    %434 = vmatpush.msra.mxu0 %v407
    %435 = vmatpush.msra.mxu0 %v406
    %436 = vmatpush.msra.mxu0 %v405
    %437 = vmatpush.msra.mxu0 %v404
    %438 = vmatpush.msra.mxu0 %v403
    %439 = vmatmul.f32.gmra.mxu0 %v378
    %v440 = vpop.f32.mrf.mxu0
    %v441 = vadd.f32 %v421, %v440
    %442 = vmatmul.f32.gmra.mxu0 %v379
    %v443 = vpop.f32.mrf.mxu0
    %v444 = vadd.f32 %v421, %v443
    %445 = vmatmul.f32.gmra.mxu0 %v380
    %v446 = vpop.f32.mrf.mxu0
    %v447 = vadd.f32 %v421, %v446
    %448 = vmatmul.f32.gmra.mxu0 %v381
    %v449 = vpop.f32.mrf.mxu0
    %v450 = vadd.f32 %v421, %v449
    %451 = vmatmul.f32.gmra.mxu0 %v382
    %v452 = vpop.f32.mrf.mxu0
    %v453 = vadd.f32 %v421, %v452
    %454 = vmatmul.f32.gmra.mxu0 %v383
    %v455 = vpop.f32.mrf.mxu0
    %v456 = vadd.f32 %v421, %v455
    %457 = vmatmul.f32.gmra.mxu0 %v384
    %v458 = vpop.f32.mrf.mxu0
    %v459 = vadd.f32 %v421, %v458
    %460 = vmatmul.f32.gmra.mxu0 %v385
    %v461 = vpop.f32.mrf.mxu0
    %v462 = vadd.f32 %v421, %v461
    %463 = vmatmul.f32.gmra.mxu0 %v386
    %v464 = vpop.f32.mrf.mxu0
    %v465 = vadd.f32 %v421, %v464
    %466 = vmatmul.f32.gmra.mxu0 %v387
    %v467 = vpop.f32.mrf.mxu0
    %v468 = vadd.f32 %v421, %v467
    %469 = vmatmul.f32.gmra.mxu0 %v388
    %v470 = vpop.f32.mrf.mxu0
    %v471 = vadd.f32 %v421, %v470
    %472 = vmatmul.f32.gmra.mxu0 %v389
    %v473 = vpop.f32.mrf.mxu0
    %v474 = vadd.f32 %v421, %v473
    %475 = vmatmul.f32.gmra.mxu0 %v390
    %v476 = vpop.f32.mrf.mxu0
    %v477 = vadd.f32 %v421, %v476
    %478 = vmatmul.f32.gmra.mxu0 %v391
    %v479 = vpop.f32.mrf.mxu0
    %v480 = vadd.f32 %v421, %v479
    %481 = vmatmul.f32.gmra.mxu0 %v392
    %v482 = vpop.f32.mrf.mxu0
    %v483 = vadd.f32 %v421, %v482
    %484 = vmatmul.f32.gmra.mxu0 %v393
    %v485 = vpop.f32.mrf.mxu0
    %v486 = vadd.f32 %v421, %v485
    %487 = vmatmul.f32.gmra.mxu0 %v394
    %v488 = vpop.f32.mrf.mxu0
    %v489 = vadd.f32 %v421, %v488
    %490 = vmatmul.f32.gmra.mxu0 %v395
    %v491 = vpop.f32.mrf.mxu0
    %v492 = vadd.f32 %v421, %v491
    %493 = vmatmul.f32.gmra.mxu0 %v396
    %v494 = vpop.f32.mrf.mxu0
    %v495 = vadd.f32 %v421, %v494
    %496 = vmatmul.f32.gmra.mxu0 %v397
    %v497 = vpop.f32.mrf.mxu0
    %v498 = vadd.f32 %v421, %v497
    %499 = vmatmul.f32.gmra.mxu0 %v398
    %v500 = vpop.f32.mrf.mxu0
    %v501 = vadd.f32 %v421, %v500
    %502 = vmatmul.f32.gmra.mxu0 %v399
    %v503 = vpop.f32.mrf.mxu0
    %v504 = vadd.f32 %v421, %v503
    %505 = vmatmul.f32.gmra.mxu0 %v400
    %v506 = vpop.f32.mrf.mxu0
    %v507 = vadd.f32 %v421, %v506
    %508 = vmatmul.f32.gmra.mxu0 %v401
    %v509 = vpop.f32.mrf.mxu0
    %v510 = vadd.f32 %v421, %v509
    %511 = vmatmul.f32.gmra.mxu0 %v402
    %v512 = vpop.f32.mrf.mxu0
    %v513 = vadd.f32 %v421, %v512
    %514 = vdwg.mxu0
    %515 = vst [vmem:[%s7] sm:$0xff] %v441
    %516 = vst [vmem:[%s7 + $0x8] sm:$0xff] %v444
    %517 = vst [vmem:[%s7 + $0x10] sm:$0xff] %v447
    %518 = vst [vmem:[%s7 + $0x18] sm:$0xff] %v450
    %519 = vst [vmem:[%s7 + $0x20] sm:$0xff] %v453
    %520 = vst [vmem:[%s7 + $0x28] sm:$0xff] %v456
    %521 = vst [vmem:[%s7 + $0x30] sm:$0xff] %v459
    %522 = vst [vmem:[%s7 + $0x38] sm:$0xff] %v462
    %523 = vst [vmem:[%s7 + $0x40] sm:$0xff] %v465
    %524 = vst [vmem:[%s7 + $0x48] sm:$0xff] %v468
    %525 = vst [vmem:[%s7 + $0x50] sm:$0xff] %v471
    %526 = vst [vmem:[%s7 + $0x58] sm:$0xff] %v474
    %527 = vst [vmem:[%s7 + $0x60] sm:$0xff] %v477
    %528 = vst [vmem:[%s7 + $0x68] sm:$0xff] %v480
    %529 = vst [vmem:[%s7 + $0x70] sm:$0xff] %v483
    %530 = vst [vmem:[%s7 + $0x78] sm:$0xff] %v486
    %531 = vst [vmem:[%s7 + $0x80] sm:$0xff] %v489
    %532 = vst [vmem:[%s7 + $0x88] sm:$0xff] %v492
    %533 = vst [vmem:[%s7 + $0x90] sm:$0xff] %v495
    %534 = vst [vmem:[%s7 + $0x98] sm:$0xff] %v498
    %535 = vst [vmem:[%s7 + $0xa0] sm:$0xff] %v501
    %536 = vst [vmem:[%s7 + $0xa8] sm:$0xff] %v504
    %537 = vst [vmem:[%s7 + $0xb0] sm:$0xff] %v507
    %538 = vst [vmem:[%s7 + $0xb8] sm:$0xff] %v510
    %539 = vst [vmem:[%s7 + $0xc0] sm:$0xff] %v513
    // Predicated region
    $region34: #{qnetwork_forward.1} parent=1 // pred_check
      _
    $region35: #{qnetwork_forward.1} parent=1 // pred_check_branch
      %541 = sbr.rel (0) target = $region37
    $region36: #{qnetwork_forward.1} parent=1 // pred_region
      _
    $region37: #{qnetwork_forward.1} parent=1 // pred_fallthru
      _
    // Predicated region
    $region38: #{qnetwork_forward.1} parent=1 // pred_check
      _
    $region39: #{qnetwork_forward.1} parent=1 // pred_check_branch
      %543 = sbr.rel (0) target = $region41
    $region40: #{qnetwork_forward.1} parent=1 // pred_region
      _
    $region41: #{qnetwork_forward.1} parent=1 // pred_fallthru
      _
    %544 = vsyncpa [#allocation3], 1

</llo_original>
